<compile_context>
chip_gen: v7x
topology: tpu7x:2x2x1
jax: 0.10.0
libtpu: 0.0.40
codegen_flags: <defaults>
</compile_context>

<pallas_src>
import functools
import math

import jax
import jax.numpy as jnp
from jax.experimental import pallas as pl
from jax.experimental.pallas import tpu as pltpu


def _pick_n_block(hidden_size):
    # Single tile for small/medium H; 256-wide column tiles (MXU-native on
    # v6e/v7x, lane-dense stores) once H is large enough to be worth
    # pipelining the whh/whr weight streams and splitting across TensorCores.
    if hidden_size <= 512 or hidden_size % 256 != 0:
        return hidden_size
    return 256


def _aligned(start):
    # Alignment hint for dynamic lane offsets (no-op for static ints).
    return start if isinstance(start, int) else pl.multiple_of(start, 128)


def prepare_gru_params(weight_ih, weight_hh, bias, hidden_size,
                       weight_dtype=jnp.bfloat16):
    """One-time (hoisted) packing of GRUCellM1 parameters.

    Call this ONCE outside any timestep loop: it slices, transposes, fuses
    and down-casts the weights so the per-step kernel call does no HBM-side
    reshuffling at all.
    """
    H = hidden_size
    # Module quirks preserved: qr uses wxz/bz, qz uses wxr/br; wxh/whz unused.
    wxr = weight_ih[:H]
    wxz = weight_ih[H:2 * H]
    whr = weight_hh[:H]
    whh = weight_hh[2 * H:]
    # Fused x-path weights: columns [0:H] feed qr, [H:2H] feed qz.
    w_x = jnp.concatenate([wxz.T, wxr.T], axis=1).astype(weight_dtype)  # (I, 2H)
    w_hr = whr.T.astype(weight_dtype)                                   # (H, H)
    w_hh = whh.T.astype(weight_dtype)                                   # (H, H)
    # Bias packed in usage order [bz | br | bh]; stays f32 (elementwise path).
    b = jnp.concatenate(
        [bias[:, H:2 * H], bias[:, :H], bias[:, 2 * H:]], axis=1
    ).astype(jnp.float32)                                               # (B, 3H)
    return {"w_x": w_x, "w_hr": w_hr, "w_hh": w_hh, "b": b}


def _gru_kernel(x_ref, hx_ref, w_x_ref, w_hr_ref, w_hh_ref, b_ref, out_ref,
                *, hidden_size, n_block, n_tiles):
    H = hidden_size
    nb = n_block

    if n_tiles == 1:
        col = 0                                        # fully static slices
    else:
        col = pl.multiple_of(pl.program_id(0) * nb, 128)

    # Full activations: f32 for VPU/EUP math, bf16 copies feed the MXU.
    x = x_ref[...]
    hx = hx_ref[...]
    x_mx = x.astype(w_x_ref.dtype)
    hx_mx = hx.astype(w_hr_ref.dtype)
    hx_f32 = hx.astype(jnp.float32)

    # x-path matmul(s): full-width qr pre-activation plus this tile's qz
    # x-contribution.  With one tile this is a single fused (B, 2H) dot.
    if n_tiles == 1:
        xw = jnp.dot(x_mx, w_x_ref[...], preferred_element_type=jnp.float32)
        qr_pre = xw[:, :H]
        qz_x = xw[:, H:]
    else:
        # TODO(synk): for very large H a two-pass design (precompute qr*hx
        # once) would avoid re-running this full-width dot per column tile.
        qr_pre = jnp.dot(x_mx, w_x_ref[:, :H],
                         preferred_element_type=jnp.float32)
        qz_x = jnp.dot(x_mx, w_x_ref[:, pl.ds(_aligned(H + col), nb)],
                       preferred_element_type=jnp.float32)

    # qr = sigmoid(x @ wxz.T + bz)     (full hidden width; feeds the whh dot)
    qr = jax.nn.sigmoid(qr_pre + b_ref[:, :H].astype(jnp.float32))

    # qz = sigmoid(x @ wxr.T + hx @ whr.T + br)   (this tile's columns only)
    qz_h = jnp.dot(hx_mx, w_hr_ref[...], preferred_element_type=jnp.float32)
    br_t = b_ref[:, pl.ds(_aligned(H + col), nb)].astype(jnp.float32)
    qz = jax.nn.sigmoid(qz_x + qz_h + br_t)

    # inner = (qr * hx) @ whh.T + tanh(x) + bh
    g = (qr * hx_f32).astype(w_hh_ref.dtype)
    contr = jnp.dot(g, w_hh_ref[...], preferred_element_type=jnp.float32)
    x_t = x_ref[:, pl.ds(_aligned(col), nb)].astype(jnp.float32)
    bh_t = b_ref[:, pl.ds(_aligned(2 * H + col), nb)].astype(jnp.float32)
    inner = contr + jnp.tanh(x_t) + bh_t

    # ht = tanh(inner)*qz + hx*(1-qz)  ==  hx + qz*(tanh(inner) - hx)
    hx_t = hx_ref[:, pl.ds(_aligned(col), nb)].astype(jnp.float32)
    ht = hx_t + qz * (jnp.tanh(inner) - hx_t)

    out_ref[...] = ht.astype(out_ref.dtype)


@functools.partial(jax.jit, static_argnames=("donate_hx",))
def gru_cell_m1(x, hx, params, *, donate_hx=False):
    """Per-timestep GRUCellM1 forward. `params` comes from prepare_gru_params.

    Set donate_hx=True when hx is dead after the call (typical scan carry) to
    alias it to the output buffer.
    """
    B, I = x.shape
    H = hx.shape[1]
    assert I == H, "GRUCellM1 requires input_size == hidden_size (tanh(x) add)"

    w_x, w_hr, w_hh, b = params["w_x"], params["w_hr"], params["w_hh"], params["b"]

    nb = _pick_n_block(H)
    n_tiles = H // nb

    kernel = functools.partial(_gru_kernel, hidden_size=H, n_block=nb,
                               n_tiles=n_tiles)

    def resident(a):
        return pl.BlockSpec(a.shape, lambda n: (0,) * a.ndim)

    in_specs = [
        resident(x),                               # x    (B, I)   resident
        resident(hx),                              # hx   (B, H)   resident
        resident(w_x),                             # w_x  (I, 2H)  resident
        pl.BlockSpec((H, nb), lambda n: (0, n)),   # whr.T column tile
        pl.BlockSpec((H, nb), lambda n: (0, n)),   # whh.T column tile
        resident(b),                               # bias (B, 3H)  resident
    ]
    out_spec = pl.BlockSpec((B, nb), lambda n: (0, n))  # lane-dense output

    return pl.pallas_call(
        kernel,
        out_shape=jax.ShapeDtypeStruct((B, H), x.dtype),
        grid=(n_tiles,),
        in_specs=in_specs,
        out_specs=out_spec,
        input_output_aliases=({1: 0} if donate_hx else {}),
        compiler_params=pltpu.CompilerParams(
            # Hidden-column tiles are independent -> split across TensorCores.
            dimension_semantics=("parallel",),
            # Headroom beyond the scoped default; safe on v5e/v6e/v7x.
            vmem_limit_bytes=48 * 1024 * 1024,
        ),
    )(x, hx, w_x, w_hr, w_hh, b)


def _reference(x, hx, weight_ih, weight_hh, bias, H, weight_dtype=jnp.bfloat16):
    """Pure-JAX reference mirroring the kernel's bf16 MXU inputs."""
    f32 = jnp.float32
    q = lambda a: a.astype(weight_dtype).astype(f32)
    wxr = q(weight_ih[:H])
    wxz = q(weight_ih[H:2 * H])
    whr = q(weight_hh[:H])
    whh = q(weight_hh[2 * H:])
    br = bias[:, :H].astype(f32)
    bz = bias[:, H:2 * H].astype(f32)
    bh = bias[:, 2 * H:].astype(f32)
    xq, hxq = q(x), q(hx)
    xf, hxf = x.astype(f32), hx.astype(f32)
    qr = jax.nn.sigmoid(xq @ wxz.T + bz)
    qz = jax.nn.sigmoid(xq @ wxr.T + hxq @ whr.T + br)
    g = q(qr * hxf)
    return jnp.tanh(g @ whh.T + jnp.tanh(xf) + bh) * qz + hxf * (1.0 - qz)


if __name__ == "__main__":
    # The module only typechecks when input_size == hidden_size.
    batch_size = 8
    input_size = 128
    hidden_size = 128

    key = jax.random.PRNGKey(0)
    k_ih, k_hh, k_b, k_x, k_h = jax.random.split(key, 5)

    # Deterministic init mirroring the PyTorch module:
    # kaiming_uniform_(a=sqrt(5)) -> U(-1/sqrt(fan_in), 1/sqrt(fan_in))
    bound_ih = 1.0 / math.sqrt(input_size)
    bound_hh = 1.0 / math.sqrt(hidden_size)
    weight_ih = jax.random.uniform(
        k_ih, (3 * hidden_size, input_size), jnp.float32,
        minval=-bound_ih, maxval=bound_ih)
    weight_hh = jax.random.uniform(
        k_hh, (3 * hidden_size, hidden_size), jnp.float32,
        minval=-bound_hh, maxval=bound_hh)
    bias = jax.random.uniform(
        k_b, (batch_size, 3 * hidden_size), jnp.float32,
        minval=-bound_ih, maxval=bound_ih)

    x = jax.random.normal(k_x, (batch_size, input_size), jnp.float32)
    hx = jax.random.normal(k_h, (batch_size, hidden_size), jnp.float32)

    # One-time (hoisted) parameter packing -- NOT redone per timestep.
    params = prepare_gru_params(weight_ih, weight_hh, bias, hidden_size)

    out = gru_cell_m1(x, hx, params)
    out = jax.block_until_ready(out)

    ref = _reference(x, hx, weight_ih, weight_hh, bias, hidden_size)
    assert out.shape == (batch_size, hidden_size)
    assert jnp.allclose(out, ref, atol=5e-3, rtol=5e-3), float(
        jnp.max(jnp.abs(out - ref)))

    print("KERNEL_OK")
</pallas_src>

<mosaic_0001>
module attributes {stable_mosaic.version = 11 : i64} {
  func.func @_gru_kernel(%arg0: i32, %arg1: memref<8x128xf32, #tpu.memory_space<vmem>>, %arg2: memref<8x128xf32, #tpu.memory_space<vmem>>, %arg3: memref<128x256xbf16, #tpu.memory_space<vmem>>, %arg4: memref<128x128xbf16, #tpu.memory_space<vmem>>, %arg5: memref<128x128xbf16, #tpu.memory_space<vmem>>, %arg6: memref<8x384xf32, #tpu.memory_space<vmem>>, %arg7: memref<8x128xf32, #tpu.memory_space<vmem>>) attributes {dimension_semantics = [#tpu.dimension_semantics<parallel>], iteration_bounds = array<i64: 1>, scalar_prefetch = 0 : i64, scratch_operands = 0 : i64, tpu.core_type = #tpu.core_type<tc>, window_params = [{pipeline_mode = #tpu.pipeline_mode<synchronous>, transform_indices = @transform_0, window_bounds = array<i64: 8, 128>}, {pipeline_mode = #tpu.pipeline_mode<synchronous>, transform_indices = @transform_1, window_bounds = array<i64: 8, 128>}, {pipeline_mode = #tpu.pipeline_mode<synchronous>, transform_indices = @transform_2, window_bounds = array<i64: 128, 256>}, {transform_indices = @transform_3, window_bounds = array<i64: 128, 128>}, {transform_indices = @transform_4, window_bounds = array<i64: 128, 128>}, {pipeline_mode = #tpu.pipeline_mode<synchronous>, transform_indices = @transform_5, window_bounds = array<i64: 8, 384>}, {transform_indices = @transform_6, window_bounds = array<i64: 8, 128>}]} {
    %c0 = arith.constant 0 : index
    %c0_0 = arith.constant 0 : index
    %0 = vector.load %arg1[%c0, %c0_0] : memref<8x128xf32, #tpu.memory_space<vmem>>, vector<8x128xf32>
    %c0_1 = arith.constant 0 : index
    %c0_2 = arith.constant 0 : index
    %1 = vector.load %arg2[%c0_1, %c0_2] : memref<8x128xf32, #tpu.memory_space<vmem>>, vector<8x128xf32>
    %2 = arith.truncf %0 : vector<8x128xf32> to vector<8x128xbf16>
    %3 = arith.truncf %1 : vector<8x128xf32> to vector<8x128xbf16>
    %c0_3 = arith.constant 0 : index
    %c0_4 = arith.constant 0 : index
    %4 = vector.load %arg3[%c0_3, %c0_4] : memref<128x256xbf16, #tpu.memory_space<vmem>>, vector<128x256xbf16>
    %cst = arith.constant dense<0.000000e+00> : vector<8x256xf32>
    %5 = tpu.matmul %2, %4, %cst {dimension_numbers = #tpu.dot_dimension_numbers<[1], [0], [0], [1], [0, 0, 1, 1], [], []>} : vector<8x128xbf16>, vector<128x256xbf16>, vector<8x256xf32> -> vector<8x256xf32>
    %6 = vector.extract_strided_slice %5 {offsets = [0, 0], sizes = [8, 128], strides = [1, 1]} : vector<8x256xf32> to vector<8x128xf32>
    %7 = vector.extract_strided_slice %5 {offsets = [0, 128], sizes = [8, 128], strides = [1, 1]} : vector<8x256xf32> to vector<8x128xf32>
    %c0_5 = arith.constant 0 : index
    %c0_6 = arith.constant 0 : index
    %8 = vector.load %arg6[%c0_5, %c0_6] : memref<8x384xf32, #tpu.memory_space<vmem>>, vector<8x128xf32>
    %9 = arith.addf %6, %8 : vector<8x128xf32>
    %10 = arith.negf %9 : vector<8x128xf32>
    %11 = math.exp %10 : vector<8x128xf32>
    %cst_7 = arith.constant 1.000000e+00 : f32
    %12 = vector.broadcast %cst_7 : f32 to vector<8x128xf32>
    %13 = arith.addf %12, %11 : vector<8x128xf32>
    %14 = arith.divf %12, %13 : vector<8x128xf32>
    %c0_8 = arith.constant 0 : index
    %c0_9 = arith.constant 0 : index
    %15 = vector.load %arg4[%c0_8, %c0_9] : memref<128x128xbf16, #tpu.memory_space<vmem>>, vector<128x128xbf16>
    %cst_10 = arith.constant dense<0.000000e+00> : vector<8x128xf32>
    %16 = tpu.matmul %3, %15, %cst_10 {dimension_numbers = #tpu.dot_dimension_numbers<[1], [0], [0], [1], [0, 0, 1, 1], [], []>} : vector<8x128xbf16>, vector<128x128xbf16>, vector<8x128xf32> -> vector<8x128xf32>
    %c0_11 = arith.constant 0 : index
    %c128 = arith.constant 128 : index
    %17 = vector.load %arg6[%c0_11, %c128] : memref<8x384xf32, #tpu.memory_space<vmem>>, vector<8x128xf32>
    %18 = arith.addf %7, %16 : vector<8x128xf32>
    %19 = arith.addf %18, %17 : vector<8x128xf32>
    %20 = arith.negf %19 : vector<8x128xf32>
    %21 = math.exp %20 : vector<8x128xf32>
    %cst_12 = arith.constant 1.000000e+00 : f32
    %22 = vector.broadcast %cst_12 : f32 to vector<8x128xf32>
    %23 = arith.addf %22, %21 : vector<8x128xf32>
    %24 = arith.divf %22, %23 : vector<8x128xf32>
    %25 = arith.mulf %14, %1 : vector<8x128xf32>
    %26 = arith.truncf %25 : vector<8x128xf32> to vector<8x128xbf16>
    %c0_13 = arith.constant 0 : index
    %c0_14 = arith.constant 0 : index
    %27 = vector.load %arg5[%c0_13, %c0_14] : memref<128x128xbf16, #tpu.memory_space<vmem>>, vector<128x128xbf16>
    %cst_15 = arith.constant dense<0.000000e+00> : vector<8x128xf32>
    %28 = tpu.matmul %26, %27, %cst_15 {dimension_numbers = #tpu.dot_dimension_numbers<[1], [0], [0], [1], [0, 0, 1, 1], [], []>} : vector<8x128xbf16>, vector<128x128xbf16>, vector<8x128xf32> -> vector<8x128xf32>
    %c0_16 = arith.constant 0 : index
    %c0_17 = arith.constant 0 : index
    %29 = vector.load %arg1[%c0_16, %c0_17] : memref<8x128xf32, #tpu.memory_space<vmem>>, vector<8x128xf32>
    %c0_18 = arith.constant 0 : index
    %c256 = arith.constant 256 : index
    %30 = vector.load %arg6[%c0_18, %c256] : memref<8x384xf32, #tpu.memory_space<vmem>>, vector<8x128xf32>
    %31 = math.tanh %29 : vector<8x128xf32>
    %32 = arith.addf %28, %31 : vector<8x128xf32>
    %33 = arith.addf %32, %30 : vector<8x128xf32>
    %c0_19 = arith.constant 0 : index
    %c0_20 = arith.constant 0 : index
    %34 = vector.load %arg2[%c0_19, %c0_20] : memref<8x128xf32, #tpu.memory_space<vmem>>, vector<8x128xf32>
    %35 = math.tanh %33 : vector<8x128xf32>
    %36 = arith.subf %35, %34 : vector<8x128xf32>
    %37 = arith.mulf %24, %36 : vector<8x128xf32>
    %38 = arith.addf %34, %37 : vector<8x128xf32>
    %c0_21 = arith.constant 0 : index
    %c0_22 = arith.constant 0 : index
    %39 = vector.load %arg7[%c0_21, %c0_22] : memref<8x128xf32, #tpu.memory_space<vmem>>, vector<8x128xf32>
    tpu.vector_store %arg7[%c0_21, %c0_22], %38 {strides = array<i32>} : memref<8x128xf32, #tpu.memory_space<vmem>>, vector<8x128xf32>,
    return
  }
  func.func @transform_0(%arg0: i32) -> (i32, i32) {
    %c0_i32 = arith.constant 0 : i32
    %c0_i32_0 = arith.constant 0 : i32
    %c0_i32_1 = arith.constant 0 : i32
    return %c0_i32, %c0_i32_0 : i32, i32
  }
  func.func @transform_1(%arg0: i32) -> (i32, i32) {
    %c0_i32 = arith.constant 0 : i32
    %c0_i32_0 = arith.constant 0 : i32
    %c0_i32_1 = arith.constant 0 : i32
    return %c0_i32, %c0_i32_0 : i32, i32
  }
  func.func @transform_2(%arg0: i32) -> (i32, i32) {
    %c0_i32 = arith.constant 0 : i32
    %c0_i32_0 = arith.constant 0 : i32
    %c0_i32_1 = arith.constant 0 : i32
    return %c0_i32, %c0_i32_0 : i32, i32
  }
  func.func @transform_3(%arg0: i32) -> (i32, i32) {
    %c0_i32 = arith.constant 0 : i32
    %c0_i32_0 = arith.constant 0 : i32
    return %c0_i32, %arg0 : i32, i32
  }
  func.func @transform_4(%arg0: i32) -> (i32, i32) {
    %c0_i32 = arith.constant 0 : i32
    %c0_i32_0 = arith.constant 0 : i32
    return %c0_i32, %arg0 : i32, i32
  }
  func.func @transform_5(%arg0: i32) -> (i32, i32) {
    %c0_i32 = arith.constant 0 : i32
    %c0_i32_0 = arith.constant 0 : i32
    %c0_i32_1 = arith.constant 0 : i32
    return %c0_i32, %c0_i32_0 : i32, i32
  }
  func.func @transform_6(%arg0: i32) -> (i32, i32) {
    %c0_i32 = arith.constant 0 : i32
    %c0_i32_0 = arith.constant 0 : i32
    return %c0_i32, %arg0 : i32, i32
  }
}

</mosaic_0001>

<llo_original>
// kernel: gru_cell_m1.1
$region0: #{gru_cell_m1.1}
  #allocation0 [shape = 'u32[]', space=smem, size = 0x4, offset = 0x4, fixed_abs, tag = 'smem constant byte address 0x4 - core index']
  #allocation1 [shape = 'u32[144,128]{1,0:T(1,128)}', space=vmem, size = 0x12000, scoped, tag = 'internal scratch']
  %s0 = inlined_call_operand.hbm [shape: f32[8,128], index: 0, kind: input, shape index: {}]
  %s1 = inlined_call_operand.hbm [shape: f32[8,128], index: 1, kind: input, shape index: {}]
  %s2 = inlined_call_operand.hbm [shape: bf16[128,256], index: 2, kind: input, shape index: {}]
  %s3 = inlined_call_operand.hbm [shape: bf16[128,128], index: 3, kind: input, shape index: {}]
  %s4 = inlined_call_operand.hbm [shape: bf16[128,128], index: 4, kind: input, shape index: {}]
  %s5 = inlined_call_operand.hbm [shape: f32[8,384], index: 5, kind: input, shape index: {}]
  %s6 = inlined_call_operand.hbm [shape: f32[8,128], index: 6, kind: output, shape index: {}]
  %s7 = sld [smem:[#allocation0]]
  $region58: #{gru_cell_m1.1} parent=0
    _
  %s9 = ssub.s32 1, %s7
  %s10 = scalar_select 0, %s9, %s7
  $region1: #{gru_cell_m1.1} parent=0
    #allocation2 [shape = 'u8[4096]{0}', space=vmem, size = 0x1000, scoped, tag = 'input window, operand 0, single buffered']
    #allocation3 [shape = 's32[1]{0}', space=sflag, size = 0x4, scoped, tag = 'scoped memory for gru_cell_m1.1']
    #allocation4 [shape = 's32[1]{0}', space=sflag, size = 0x4, scoped, tag = 'scoped memory for gru_cell_m1.1']
    #allocation5 [shape = 'u8[4096]{0}', space=vmem, size = 0x1000, scoped, tag = 'input window, operand 1, single buffered']
    #allocation6 [shape = 's32[1]{0}', space=sflag, size = 0x4, scoped, tag = 'scoped memory for gru_cell_m1.1']
    #allocation7 [shape = 'u8[65536]{0}', space=vmem, size = 0x10000, scoped, tag = 'input window, operand 2, single buffered']
    #allocation8 [shape = 'u8[32768]{0}', space=vmem, size = 0x8000, scoped, tag = 'input window, operand 3, single buffered']
    #allocation9 [shape = 's32[1]{0}', space=sflag, size = 0x4, scoped, tag = 'scoped memory for gru_cell_m1.1']
    #allocation10 [shape = 'u8[32768]{0}', space=vmem, size = 0x8000, scoped, tag = 'input window, operand 4, single buffered']
    #allocation11 [shape = 'u8[12288]{0}', space=vmem, size = 0x3000, scoped, tag = 'input window, operand 5, single buffered']
    #allocation12 [shape = 's32[1]{0}', space=sflag, size = 0x4, scoped, tag = 'scoped memory for gru_cell_m1.1']
    #allocation13 [shape = 'u8[4096]{0}', space=vmem, size = 0x1000, scoped, tag = 'output window, operand 0, single buffered']
    %11 = vsyncpa [#allocation3], 0
    %12 = vsyncpa [#allocation6], 0
    %13 = vsyncpa [#allocation9], 0
    %14 = vsyncpa [#allocation12], 0
    %15 = vsyncpa [#allocation4], 0
    // Predicated region
    $region2: #{gru_cell_m1.1} parent=1 // pred_check
      _
    $region3: #{gru_cell_m1.1} parent=1 // pred_check_branch
      %17 = sbr.rel (0) target = $region5
    $region4: #{gru_cell_m1.1} parent=1 // pred_region
      %s19 = ssub.s32 128, 128
      %20 = vsyncadd [#allocation3], %s19
      %s22 = sshll.u32 [#allocation2], 4
      %s23 = int_to_ptr.vmem [resolvable:$true] %s22
      %25 = dma.hbm_to_vmem [thread:$0]  %s0, 128, %s23, [#allocation3]
    $region5: #{gru_cell_m1.1} parent=1 // pred_fallthru
      _
    // Predicated region
    $region6: #{gru_cell_m1.1} parent=1 // pred_check
      _
    $region7: #{gru_cell_m1.1} parent=1 // pred_check_branch
      %27 = sbr.rel (0) target = $region9
    $region8: #{gru_cell_m1.1} parent=1 // pred_region
      %s29 = ssub.s32 128, 128
      %30 = vsyncadd [#allocation6], %s29
      %s32 = sshll.u32 [#allocation5], 4
      %s33 = int_to_ptr.vmem [resolvable:$true] %s32
      %35 = dma.hbm_to_vmem [thread:$0]  %s1, 128, %s33, [#allocation6]
    $region9: #{gru_cell_m1.1} parent=1 // pred_fallthru
      _
    // Predicated region
    $region10: #{gru_cell_m1.1} parent=1 // pred_check
      _
    $region11: #{gru_cell_m1.1} parent=1 // pred_check_branch
      %37 = sbr.rel (0) target = $region13
    $region12: #{gru_cell_m1.1} parent=1 // pred_region
      %s39 = ssub.s32 2048, 2048
      %40 = vsyncadd [#allocation6], %s39
      %s41 = sshll.u32 [#allocation7], 4
      %s42 = int_to_ptr.vmem [resolvable:$true] %s41
      %47 = dma.hbm_to_vmem [thread:$0]  %s2, 2048, %s42, [#allocation6], 128, 128, 8
    $region13: #{gru_cell_m1.1} parent=1 // pred_fallthru
      _
    // Predicated region
    $region14: #{gru_cell_m1.1} parent=1 // pred_check
      _
    $region15: #{gru_cell_m1.1} parent=1 // pred_check_branch
      %49 = sbr.rel (0) target = $region17
    $region16: #{gru_cell_m1.1} parent=1 // pred_region
      %s51 = ssub.s32 1024, 1024
      %52 = vsyncadd [#allocation9], %s51
      %s53 = sshll.u32 [#allocation8], 4
      %s54 = int_to_ptr.vmem [resolvable:$true] %s53
      %59 = dma.hbm_to_vmem [thread:$0]  %s3, 1024, %s54, [#allocation9], 64, 64, 4
    $region17: #{gru_cell_m1.1} parent=1 // pred_fallthru
      _
    // Predicated region
    $region18: #{gru_cell_m1.1} parent=1 // pred_check
      _
    $region19: #{gru_cell_m1.1} parent=1 // pred_check_branch
      %61 = sbr.rel (0) target = $region21
    $region20: #{gru_cell_m1.1} parent=1 // pred_region
      %s63 = ssub.s32 1024, 1024
      %64 = vsyncadd [#allocation9], %s63
      %s65 = sshll.u32 [#allocation10], 4
      %s66 = int_to_ptr.vmem [resolvable:$true] %s65
      %71 = dma.hbm_to_vmem [thread:$0]  %s4, 1024, %s66, [#allocation9], 64, 64, 4
    $region21: #{gru_cell_m1.1} parent=1 // pred_fallthru
      _
    // Predicated region
    $region22: #{gru_cell_m1.1} parent=1 // pred_check
      _
    $region23: #{gru_cell_m1.1} parent=1 // pred_check_branch
      %73 = sbr.rel (0) target = $region25
    $region24: #{gru_cell_m1.1} parent=1 // pred_region
      %s75 = ssub.s32 384, 384
      %76 = vsyncadd [#allocation12], %s75
      %s78 = sshll.u32 [#allocation11], 4
      %s79 = int_to_ptr.vmem [resolvable:$true] %s78
      %81 = dma.hbm_to_vmem [thread:$0]  %s5, 384, %s79, [#allocation12]
    $region25: #{gru_cell_m1.1} parent=1 // pred_fallthru
      _
    // Predicated region
    $region26: #{gru_cell_m1.1} parent=1 // pred_check
      _
    $region27: #{gru_cell_m1.1} parent=1 // pred_check_branch
      %83 = sbr.rel (0) target = $region29
    $region28: #{gru_cell_m1.1} parent=1 // pred_region
      %84 = dma.done [#allocation3], 128
    $region29: #{gru_cell_m1.1} parent=1 // pred_fallthru
      _
    // Predicated region
    $region30: #{gru_cell_m1.1} parent=1 // pred_check
      _
    $region31: #{gru_cell_m1.1} parent=1 // pred_check_branch
      %86 = sbr.rel (0) target = $region33
    $region32: #{gru_cell_m1.1} parent=1 // pred_region
      %87 = dma.done [#allocation6], 128
    $region33: #{gru_cell_m1.1} parent=1 // pred_fallthru
      _
    // Predicated region
    $region34: #{gru_cell_m1.1} parent=1 // pred_check
      _
    $region35: #{gru_cell_m1.1} parent=1 // pred_check_branch
      %89 = sbr.rel (0) target = $region37
    $region36: #{gru_cell_m1.1} parent=1 // pred_region
      %90 = dma.done [#allocation6], 2048
    $region37: #{gru_cell_m1.1} parent=1 // pred_fallthru
      _
    // Predicated region
    $region38: #{gru_cell_m1.1} parent=1 // pred_check
      _
    $region39: #{gru_cell_m1.1} parent=1 // pred_check_branch
      %92 = sbr.rel (0) target = $region41
    $region40: #{gru_cell_m1.1} parent=1 // pred_region
      %93 = dma.done [#allocation9], 1024
    $region41: #{gru_cell_m1.1} parent=1 // pred_fallthru
      _
    // Predicated region
    $region42: #{gru_cell_m1.1} parent=1 // pred_check
      _
    $region43: #{gru_cell_m1.1} parent=1 // pred_check_branch
      %95 = sbr.rel (0) target = $region45
    $region44: #{gru_cell_m1.1} parent=1 // pred_region
      %96 = dma.done [#allocation9], 1024
    $region45: #{gru_cell_m1.1} parent=1 // pred_fallthru
      _
    // Predicated region
    $region46: #{gru_cell_m1.1} parent=1 // pred_check
      _
    $region47: #{gru_cell_m1.1} parent=1 // pred_check_branch
      %98 = sbr.rel (0) target = $region49
    $region48: #{gru_cell_m1.1} parent=1 // pred_region
      %99 = dma.done [#allocation12], 384
    $region49: #{gru_cell_m1.1} parent=1 // pred_fallthru
      _
    %v101 = vld [vmem:[#allocation2] sm:$0xff]
    %v102 = vld [vmem:[#allocation5] sm:$0xff]
    %v103 = vpack.c.bf16 %v101, %v101
    %v104 = vpack.c.bf16 %v102, %v102
    %v105 = vld [vmem:[#allocation7] sm:$0xff]
    %v106 = vld [vmem:[#allocation7 + $0x8] sm:$0xff]
    %v107 = vld [vmem:[#allocation7 + $0x10] sm:$0xff]
    %v108 = vld [vmem:[#allocation7 + $0x18] sm:$0xff]
    %v109 = vld [vmem:[#allocation7 + $0x20] sm:$0xff]
    %v110 = vld [vmem:[#allocation7 + $0x28] sm:$0xff]
    %v111 = vld [vmem:[#allocation7 + $0x30] sm:$0xff]
    %v112 = vld [vmem:[#allocation7 + $0x38] sm:$0xff]
    %v113 = vld [vmem:[#allocation7 + $0x40] sm:$0xff]
    %v114 = vld [vmem:[#allocation7 + $0x48] sm:$0xff]
    %v115 = vld [vmem:[#allocation7 + $0x50] sm:$0xff]
    %v116 = vld [vmem:[#allocation7 + $0x58] sm:$0xff]
    %v117 = vld [vmem:[#allocation7 + $0x60] sm:$0xff]
    %v118 = vld [vmem:[#allocation7 + $0x68] sm:$0xff]
    %v119 = vld [vmem:[#allocation7 + $0x70] sm:$0xff]
    %v120 = vld [vmem:[#allocation7 + $0x78] sm:$0xff]
    %v137 = vunpack.c.l.b16 %v105
    %v138 = vunpack.c.h.b16 %v105
    %v139 = vunpack.c.l.b16 %v106
    %v140 = vunpack.c.h.b16 %v106
    %v141 = vunpack.c.l.b16 %v107
    %v142 = vunpack.c.h.b16 %v107
    %v143 = vunpack.c.l.b16 %v108
    %v144 = vunpack.c.h.b16 %v108
    %v145 = vunpack.c.l.b16 %v109
    %v146 = vunpack.c.h.b16 %v109
    %v147 = vunpack.c.l.b16 %v110
    %v148 = vunpack.c.h.b16 %v110
    %v149 = vunpack.c.l.b16 %v111
    %v150 = vunpack.c.h.b16 %v111
    %v151 = vunpack.c.l.b16 %v112
    %v152 = vunpack.c.h.b16 %v112
    %v153 = vunpack.c.l.b16 %v113
    %v154 = vunpack.c.h.b16 %v113
    %v155 = vunpack.c.l.b16 %v114
    %v156 = vunpack.c.h.b16 %v114
    %v157 = vunpack.c.l.b16 %v115
    %v158 = vunpack.c.h.b16 %v115
    %v159 = vunpack.c.l.b16 %v116
    %v160 = vunpack.c.h.b16 %v116
    %v161 = vunpack.c.l.b16 %v117
    %v162 = vunpack.c.h.b16 %v117
    %v163 = vunpack.c.l.b16 %v118
    %v164 = vunpack.c.h.b16 %v118
    %v165 = vunpack.c.l.b16 %v119
    %v166 = vunpack.c.h.b16 %v119
    %v167 = vunpack.c.l.b16 %v120
    %v168 = vunpack.c.h.b16 %v120
    %v169 = vpack.c.b16 %v139, %v137
    %v170 = vpack.c.b16 %v140, %v138
    %v171 = vpack.c.b16 %v143, %v141
    %v172 = vpack.c.b16 %v144, %v142
    %v173 = vpack.c.b16 %v147, %v145
    %v174 = vpack.c.b16 %v148, %v146
    %v175 = vpack.c.b16 %v151, %v149
    %v176 = vpack.c.b16 %v152, %v150
    %v177 = vpack.c.b16 %v155, %v153
    %v178 = vpack.c.b16 %v156, %v154
    %v179 = vpack.c.b16 %v159, %v157
    %v180 = vpack.c.b16 %v160, %v158
    %v181 = vpack.c.b16 %v163, %v161
    %v182 = vpack.c.b16 %v164, %v162
    %v183 = vpack.c.b16 %v167, %v165
    %v184 = vpack.c.b16 %v168, %v166
    %201 = vmatprep.subr.bf16.mxu0 %v170
    %202 = vmatpush1.bf16.msra.mxu0 %v169
    %203 = vmatprep.subr.bf16.mxu0 %v172
    %204 = vmatpush1.bf16.msra.mxu0 %v171
    %205 = vmatprep.subr.bf16.mxu0 %v174
    %206 = vmatpush1.bf16.msra.mxu0 %v173
    %207 = vmatprep.subr.bf16.mxu0 %v176
    %208 = vmatpush1.bf16.msra.mxu0 %v175
    %209 = vmatprep.subr.bf16.mxu0 %v178
    %210 = vmatpush1.bf16.msra.mxu0 %v177
    %211 = vmatprep.subr.bf16.mxu0 %v180
    %212 = vmatpush1.bf16.msra.mxu0 %v179
    %213 = vmatprep.subr.bf16.mxu0 %v182
    %214 = vmatpush1.bf16.msra.mxu0 %v181
    %215 = vmatprep.subr.bf16.mxu0 %v184
    %216 = vmatpush1.bf16.msra.mxu0 %v183
    %217 = vmatprep.subr.bf16.mxu0 0
    %218 = vmatpush1.bf16.msra.mxu0 0
    %219 = vmatprep.subr.bf16.mxu0 0
    %220 = vmatpush1.bf16.msra.mxu0 0
    %221 = vmatprep.subr.bf16.mxu0 0
    %222 = vmatpush1.bf16.msra.mxu0 0
    %223 = vmatprep.subr.bf16.mxu0 0
    %224 = vmatpush1.bf16.msra.mxu0 0
    %225 = vmatprep.subr.bf16.mxu0 0
    %226 = vmatpush1.bf16.msra.mxu0 0
    %227 = vmatprep.subr.bf16.mxu0 0
    %228 = vmatpush1.bf16.msra.mxu0 0
    %229 = vmatprep.subr.bf16.mxu0 0
    %230 = vmatpush1.bf16.msra.mxu0 0
    %231 = vmatprep.subr.bf16.mxu0 0
    %232 = vmatpush1.bf16.msra.mxu0 0
    %233 = vmatprep.mubr.bf16.mxu0 0
    %234 = vmatmul.mubr.bf16.gmra.mrb[0].mxu0 %v103
    %v235 = vpop.f32.mrb[0].mxu0
    %v236 = vadd.f32 0.0, %v235
    %v237 = vpop.f32.mrb[0].mxu0
    %v238 = vadd.f32 0.0, %v237
    %v239 = vpop.f32.mrb[0].mxu0
    %v240 = vpop.f32.mrb[0].mxu0
    %241 = vdwg.mxu0
    %v242 = vld [vmem:[#allocation11] sm:$0xff]
    %v243 = vadd.f32 %v236, %v242
    %v244 = vxor.u32 %v243, 2147483648
    %v245 = vmul.f32 %v244, 1.442695
    %v246 = vpow.pop %v245
    %v247 = vadd.f32 %v246, 1.0
    %v248 = vrcp.pop %v247
    %v249 = vmul.f32 1.0, %v248
    %v250 = vld [vmem:[#allocation8] sm:$0xf]
    %v251 = vld [vmem:[#allocation8 + $0x4] sm:$0xf]
    %v252 = vld [vmem:[#allocation8 + $0x8] sm:$0xf]
    %v253 = vld [vmem:[#allocation8 + $0xc] sm:$0xf]
    %v254 = vld [vmem:[#allocation8 + $0x10] sm:$0xf]
    %v255 = vld [vmem:[#allocation8 + $0x14] sm:$0xf]
    %v256 = vld [vmem:[#allocation8 + $0x18] sm:$0xf]
    %v257 = vld [vmem:[#allocation8 + $0x1c] sm:$0xf]
    %v258 = vld [vmem:[#allocation8 + $0x20] sm:$0xf]
    %v259 = vld [vmem:[#allocation8 + $0x24] sm:$0xf]
    %v260 = vld [vmem:[#allocation8 + $0x28] sm:$0xf]
    %v261 = vld [vmem:[#allocation8 + $0x2c] sm:$0xf]
    %v262 = vld [vmem:[#allocation8 + $0x30] sm:$0xf]
    %v263 = vld [vmem:[#allocation8 + $0x34] sm:$0xf]
    %v264 = vld [vmem:[#allocation8 + $0x38] sm:$0xf]
    %v265 = vld [vmem:[#allocation8 + $0x3c] sm:$0xf]
    %v282 = vunpack.c.l.b16 %v250
    %v283 = vunpack.c.l.b16 %v251
    %v284 = vunpack.c.l.b16 %v252
    %v285 = vunpack.c.l.b16 %v253
    %v286 = vunpack.c.l.b16 %v254
    %v287 = vunpack.c.l.b16 %v255
    %v288 = vunpack.c.l.b16 %v256
    %v289 = vunpack.c.l.b16 %v257
    %v290 = vunpack.c.l.b16 %v258
    %v291 = vunpack.c.l.b16 %v259
    %v292 = vunpack.c.l.b16 %v260
    %v293 = vunpack.c.l.b16 %v261
    %v294 = vunpack.c.l.b16 %v262
    %v295 = vunpack.c.l.b16 %v263
    %v296 = vunpack.c.l.b16 %v264
    %v297 = vunpack.c.l.b16 %v265
    %v298 = vpack.c.b16 %v283, %v282
    %v299 = vpack.c.b16 %v285, %v284
    %v300 = vpack.c.b16 %v287, %v286
    %v301 = vpack.c.b16 %v289, %v288
    %v302 = vpack.c.b16 %v291, %v290
    %v303 = vpack.c.b16 %v293, %v292
    %v304 = vpack.c.b16 %v295, %v294
    %v305 = vpack.c.b16 %v297, %v296
    %314 = vmatprep.subr.bf16.mxu0 0
    %315 = vmatpush1.bf16.msra.mxu0 %v298
    %316 = vmatprep.subr.bf16.mxu0 0
    %317 = vmatpush1.bf16.msra.mxu0 %v299
    %318 = vmatprep.subr.bf16.mxu0 0
    %319 = vmatpush1.bf16.msra.mxu0 %v300
    %320 = vmatprep.subr.bf16.mxu0 0
    %321 = vmatpush1.bf16.msra.mxu0 %v301
    %322 = vmatprep.subr.bf16.mxu0 0
    %323 = vmatpush1.bf16.msra.mxu0 %v302
    %324 = vmatprep.subr.bf16.mxu0 0
    %325 = vmatpush1.bf16.msra.mxu0 %v303
    %326 = vmatprep.subr.bf16.mxu0 0
    %327 = vmatpush1.bf16.msra.mxu0 %v304
    %328 = vmatprep.subr.bf16.mxu0 0
    %329 = vmatpush1.bf16.msra.mxu0 %v305
    %330 = vmatprep.subr.bf16.mxu0 0
    %331 = vmatpush1.bf16.msra.mxu0 0
    %332 = vmatprep.subr.bf16.mxu0 0
    %333 = vmatpush1.bf16.msra.mxu0 0
    %334 = vmatprep.subr.bf16.mxu0 0
    %335 = vmatpush1.bf16.msra.mxu0 0
    %336 = vmatprep.subr.bf16.mxu0 0
    %337 = vmatpush1.bf16.msra.mxu0 0
    %338 = vmatprep.subr.bf16.mxu0 0
    %339 = vmatpush1.bf16.msra.mxu0 0
    %340 = vmatprep.subr.bf16.mxu0 0
    %341 = vmatpush1.bf16.msra.mxu0 0
    %342 = vmatprep.subr.bf16.mxu0 0
    %343 = vmatpush1.bf16.msra.mxu0 0
    %344 = vmatprep.subr.bf16.mxu0 0
    %345 = vmatpush1.bf16.msra.mxu0 0
    %346 = vmatprep.mubr.bf16.mxu0 0
    %347 = vmatmul.mubr.bf16.gmra.mrb[0].mxu0 %v104
    %v348 = vpop.f32.mrb[0].mxu0
    %v349 = vadd.f32 0.0, %v348
    %v350 = vpop.f32.mrb[0].mxu0
    %v351 = vpop.f32.mrb[0].mxu0
    %v352 = vpop.f32.mrb[0].mxu0
    %353 = vdwg.mxu0
    %v354 = vld [vmem:[#allocation11 + $0x8] sm:$0xff]
    %v355 = vadd.f32 %v238, %v349
    %v356 = vadd.f32 %v355, %v354
    %v357 = vxor.u32 %v356, 2147483648
    %v358 = vmul.f32 %v357, 1.442695
    %v359 = vpow.pop %v358
    %v360 = vadd.f32 %v359, 1.0
    %v361 = vrcp.pop %v360
    %v362 = vmul.f32 1.0, %v361
    %v363 = vmul.f32 %v249, %v102
    %v364 = vpack.c.bf16 %v363, %v363
    %v365 = vld [vmem:[#allocation10] sm:$0xf]
    %v366 = vld [vmem:[#allocation10 + $0x4] sm:$0xf]
    %v367 = vld [vmem:[#allocation10 + $0x8] sm:$0xf]
    %v368 = vld [vmem:[#allocation10 + $0xc] sm:$0xf]
    %v369 = vld [vmem:[#allocation10 + $0x10] sm:$0xf]
    %v370 = vld [vmem:[#allocation10 + $0x14] sm:$0xf]
    %v371 = vld [vmem:[#allocation10 + $0x18] sm:$0xf]
    %v372 = vld [vmem:[#allocation10 + $0x1c] sm:$0xf]
    %v373 = vld [vmem:[#allocation10 + $0x20] sm:$0xf]
    %v374 = vld [vmem:[#allocation10 + $0x24] sm:$0xf]
    %v375 = vld [vmem:[#allocation10 + $0x28] sm:$0xf]
    %v376 = vld [vmem:[#allocation10 + $0x2c] sm:$0xf]
    %v377 = vld [vmem:[#allocation10 + $0x30] sm:$0xf]
    %v378 = vld [vmem:[#allocation10 + $0x34] sm:$0xf]
    %v379 = vld [vmem:[#allocation10 + $0x38] sm:$0xf]
    %v380 = vld [vmem:[#allocation10 + $0x3c] sm:$0xf]
    %v381 = vld [vmem:[#allocation11 + $0x10] sm:$0xff]
    %v382 = vtanh.pop %v101
    %v399 = vunpack.c.l.b16 %v365
    %v400 = vunpack.c.l.b16 %v366
    %v401 = vunpack.c.l.b16 %v367
    %v402 = vunpack.c.l.b16 %v368
    %v403 = vunpack.c.l.b16 %v369
    %v404 = vunpack.c.l.b16 %v370
    %v405 = vunpack.c.l.b16 %v371
    %v406 = vunpack.c.l.b16 %v372
    %v407 = vunpack.c.l.b16 %v373
    %v408 = vunpack.c.l.b16 %v374
    %v409 = vunpack.c.l.b16 %v375
    %v410 = vunpack.c.l.b16 %v376
    %v411 = vunpack.c.l.b16 %v377
    %v412 = vunpack.c.l.b16 %v378
    %v413 = vunpack.c.l.b16 %v379
    %v414 = vunpack.c.l.b16 %v380
    %v415 = vpack.c.b16 %v400, %v399
    %v416 = vpack.c.b16 %v402, %v401
    %v417 = vpack.c.b16 %v404, %v403
    %v418 = vpack.c.b16 %v406, %v405
    %v419 = vpack.c.b16 %v408, %v407
    %v420 = vpack.c.b16 %v410, %v409
    %v421 = vpack.c.b16 %v412, %v411
    %v422 = vpack.c.b16 %v414, %v413
    %431 = vmatprep.subr.bf16.mxu0 0
    %432 = vmatpush1.bf16.msra.mxu0 %v415
    %433 = vmatprep.subr.bf16.mxu0 0
    %434 = vmatpush1.bf16.msra.mxu0 %v416
    %435 = vmatprep.subr.bf16.mxu0 0
    %436 = vmatpush1.bf16.msra.mxu0 %v417
    %437 = vmatprep.subr.bf16.mxu0 0
    %438 = vmatpush1.bf16.msra.mxu0 %v418
    %439 = vmatprep.subr.bf16.mxu0 0
    %440 = vmatpush1.bf16.msra.mxu0 %v419
    %441 = vmatprep.subr.bf16.mxu0 0
    %442 = vmatpush1.bf16.msra.mxu0 %v420
    %443 = vmatprep.subr.bf16.mxu0 0
    %444 = vmatpush1.bf16.msra.mxu0 %v421
    %445 = vmatprep.subr.bf16.mxu0 0
    %446 = vmatpush1.bf16.msra.mxu0 %v422
    %447 = vmatprep.subr.bf16.mxu0 0
    %448 = vmatpush1.bf16.msra.mxu0 0
    %449 = vmatprep.subr.bf16.mxu0 0
    %450 = vmatpush1.bf16.msra.mxu0 0
    %451 = vmatprep.subr.bf16.mxu0 0
    %452 = vmatpush1.bf16.msra.mxu0 0
    %453 = vmatprep.subr.bf16.mxu0 0
    %454 = vmatpush1.bf16.msra.mxu0 0
    %455 = vmatprep.subr.bf16.mxu0 0
    %456 = vmatpush1.bf16.msra.mxu0 0
    %457 = vmatprep.subr.bf16.mxu0 0
    %458 = vmatpush1.bf16.msra.mxu0 0
    %459 = vmatprep.subr.bf16.mxu0 0
    %460 = vmatpush1.bf16.msra.mxu0 0
    %461 = vmatprep.subr.bf16.mxu0 0
    %462 = vmatpush1.bf16.msra.mxu0 0
    %463 = vmatprep.mubr.bf16.mxu0 0
    %464 = vmatmul.mubr.bf16.gmra.mrb[0].mxu0 %v364
    %v465 = vpop.f32.mrb[0].mxu0
    %v466 = vadd.f32 %v382, %v465
    %v467 = vpop.f32.mrb[0].mxu0
    %v468 = vpop.f32.mrb[0].mxu0
    %v469 = vpop.f32.mrb[0].mxu0
    %470 = vdwg.mxu0
    %v471 = vadd.f32 %v466, %v381
    %v472 = vtanh.pop %v471
    %v473 = vsub.f32 %v472, %v102
    %v474 = vmul.f32 %v362, %v473
    %v475 = vadd.f32 %v102, %v474
    %476 = vst [vmem:[#allocation13] sm:$0xff] %v475
    // Predicated region
    $region50: #{gru_cell_m1.1} parent=1 // pred_check
      _
    $region51: #{gru_cell_m1.1} parent=1 // pred_check_branch
      %478 = sbr.rel (0) target = $region53
    $region52: #{gru_cell_m1.1} parent=1 // pred_region
      %s480 = ssub.s32 128, 128
      %481 = vsyncadd [#allocation4], %s480
      %s483 = sshll.u32 [#allocation13], 4
      %s484 = int_to_ptr.vmem [resolvable:$true] %s483
      %486 = dma.vmem_to_hbm [thread:$0]  %s484, 128, %s6, [#allocation4]
    $region53: #{gru_cell_m1.1} parent=1 // pred_fallthru
      _
    // Predicated region
    $region54: #{gru_cell_m1.1} parent=1 // pred_check
      _
    $region55: #{gru_cell_m1.1} parent=1 // pred_check_branch
      %488 = sbr.rel (0) target = $region57
    $region56: #{gru_cell_m1.1} parent=1 // pred_region
      %489 = dma.done [#allocation4], 128
    $region57: #{gru_cell_m1.1} parent=1 // pred_fallthru
      _
    %490 = vsyncpa [#allocation3], 1
    %491 = vsyncpa [#allocation6], 1
    %492 = vsyncpa [#allocation9], 1
    %493 = vsyncpa [#allocation12], 1
    %494 = vsyncpa [#allocation4], 1

</llo_original>
